<compile_context>
chip_gen: v6e
topology: v6e:2x2x1
jax: 0.10.0
libtpu: 0.0.40
codegen_flags: <defaults>
</compile_context>

<pallas_src>
import jax
import jax.numpy as jnp
import numpy as np
from jax.experimental import pallas as pl
from jax.experimental.pallas import tpu as pltpu

# ----- model hyper-params (scaled-down ViT-style patch embed) -----
PATCH = 16          # patch size (same as vit_base_patch16)
IN_CHANS = 3        # RGB
EMBED = 128         # embed dim (768 in the real model; reduced for a small run)


# ---------------- Pallas kernel: A-streaming matmul + fused bias ----------------
def patch_embed_kernel(a_ref, w_ref, b_ref, o_ref):
    # A tile (tm, K) @ W (K, N) on the MXU with f32 accumulation; bias folded in.
    o_ref[...] = (
        jnp.dot(a_ref[...], w_ref[...], preferred_element_type=jnp.float32)
        + b_ref[...]
    ).astype(o_ref.dtype)


def _round_up(x, m):
    return ((x + m - 1) // m) * m


def _choose_tm(m, dtype):
    """Pick the M-tile: big enough to amortize per-step overhead (~0.35us),
    small enough that the grid keeps >= 2 steps (v7x megacore), multiple of the
    sublane packing (8 for f32, 16 for bf16) unless it is the full M."""
    mult = 8 * (4 // np.dtype(dtype).itemsize)   # f32 -> 8, bf16 -> 16
    if m <= 2 * mult:
        return m                                 # tiny problem: one full-M block
    return min(512, _round_up(pl.cdiv(m, 2), mult))


def patch_embed_matmul(a, w, bias, *, tm=None, out_dtype=jnp.float32):
    """a: (M, K), w: (K, N), bias: (N,) -> (M, N) in out_dtype.

    W and bias are VMEM-resident (constant index_map); A streams over a 1-D M
    grid.  M need not be a multiple of tm: the ragged last block is masked by
    Pallas (no wrapper-side pad, no output slice copy).
    """
    M, K = a.shape
    Kw, N = w.shape
    assert Kw == K and bias.shape == (N,)
    assert K % 8 == 0 and N % 128 == 0

    if tm is None:
        tm = _choose_tm(M, a.dtype)
    grid_m = pl.cdiv(M, tm)
    bias2d = bias.reshape(1, N).astype(jnp.float32)

    bytes_accessed = (
        M * K * a.dtype.itemsize          # A read
        + K * N * w.dtype.itemsize        # W read (resident; read once)
        + N * 4                           # bias
        + M * N * np.dtype(out_dtype).itemsize   # output write
    )

    return pl.pallas_call(
        patch_embed_kernel,
        out_shape=jax.ShapeDtypeStruct((M, N), out_dtype),
        grid_spec=pltpu.PrefetchScalarGridSpec(
            num_scalar_prefetch=0,
            grid=(grid_m,),
            in_specs=[
                pl.BlockSpec((tm, K), lambda i: (i, 0)),   # A: streamed over M
                pl.BlockSpec((K, N), lambda i: (0, 0)),    # W: resident in VMEM
                pl.BlockSpec((1, N), lambda i: (0, 0)),    # bias: resident
            ],
            out_specs=pl.BlockSpec((tm, N), lambda i: (i, 0)),
        ),
        compiler_params=pltpu.CompilerParams(
            # v7x: shards the M steps across both TensorCores.
            dimension_semantics=("parallel",),
        ),
        cost_estimate=pl.CostEstimate(
            flops=2 * M * K * N,
            transcendentals=0,
            bytes_accessed=bytes_accessed,
        ),
    )(a, w, bias2d)


# ---------------- plain-JAX glue ----------------
def im2col_nchw(x, patch):
    """NCHW -> (B, num_patches, C*patch*patch), flattened in (C, kh, kw) order
    to match PyTorch Conv2d weight flattening."""
    B, C, H, W = x.shape
    ph, pw = H // patch, W // patch
    x = x.reshape(B, C, ph, patch, pw, patch)
    x = x.transpose(0, 2, 4, 1, 3, 5)  # (B, ph, pw, C, kh, kw)
    return x.reshape(B, ph * pw, C * patch * patch)


def init_params(key):
    k_w, k_b, k_cls = jax.random.split(key, 3)
    # Conv2d(IN_CHANS, EMBED, kernel=PATCH, stride=PATCH) weights
    proj_w = jax.random.normal(k_w, (EMBED, IN_CHANS, PATCH, PATCH), jnp.float32) * 0.02
    proj_b = jax.random.normal(k_b, (EMBED,), jnp.float32) * 0.02
    # cls_token exists in the module but its row is sliced off before returning.
    cls_token = jax.random.normal(k_cls, (1, 1, EMBED), jnp.float32) * 0.02
    # pos_embed exists in the module, but `x + self.pos_embed` is never assigned
    # in the reference forward, so it cannot affect the output -> omitted here.
    return {"proj_w": proj_w, "proj_b": proj_b, "cls_token": cls_token}


def forward(x, params, *, compute_dtype=jnp.bfloat16, out_dtype=jnp.float32):
    """x: (B, C, H, W) NCHW float32 -> (B, num_patches, EMBED) in out_dtype.

    compute_dtype=bf16 (default) halves A/W HBM traffic and uses the fast MXU
    path on v5e/v6e/v7x; accumulation and bias add stay in f32 inside the
    kernel.  Pass compute_dtype=jnp.float32 for bit-accurate f32 math.
    """
    B, C, H, W = x.shape
    num_patches = (H // PATCH) * (W // PATCH)

    # Cast BEFORE im2col so the materialized A is already half-width.
    a = im2col_nchw(x.astype(compute_dtype), PATCH)
    a = a.reshape(B * num_patches, C * PATCH * PATCH)
    w = params["proj_w"].reshape(EMBED, C * PATCH * PATCH).T.astype(compute_dtype)

    tokens = patch_embed_matmul(a, w, params["proj_b"], out_dtype=out_dtype)
    tokens = tokens.reshape(B, num_patches, EMBED)

    # Reference: cat(cls_token, tokens); (x + pos_embed discarded); x[:, 1:, :].
    # The cls row is immediately sliced off, so the concat + slice is a no-op ->
    # return the patch tokens directly (saves one HBM round-trip).
    return tokens                                            # (B, P, D)


if __name__ == "__main__":
    key = jax.random.PRNGKey(0)
    k_params, k_x, k_x2 = jax.random.split(key, 3)
    params = init_params(k_params)

    w32 = params["proj_w"].reshape(EMBED, -1).T              # (K, D) f32
    w16 = w32.astype(jnp.bfloat16).astype(jnp.float32)

    # ---- case 1: small module-consistent input (2x2 = 4 patches / image) ----
    B, H, W = 2, 32, 32
    x = jax.random.normal(k_x, (B, IN_CHANS, H, W), jnp.float32)

    out = jax.block_until_ready(forward(x, params))          # bf16 compute (default)
    assert out.shape == (B, 4, EMBED)

    a32 = im2col_nchw(x, PATCH).reshape(-1, IN_CHANS * PATCH * PATCH)
    a16 = a32.astype(jnp.bfloat16).astype(jnp.float32)
    ref16 = (a16 @ w16 + params["proj_b"]).reshape(B, -1, EMBED)
    assert jnp.allclose(out, ref16, atol=2e-3, rtol=2e-3)

    # f32 path: tight tolerance against the plain-JAX reference.
    out32 = jax.block_until_ready(forward(x, params, compute_dtype=jnp.float32))
    ref32 = (a32 @ w32 + params["proj_b"]).reshape(B, -1, EMBED)
    assert jnp.allclose(out32, ref32, atol=1e-4, rtol=1e-4)

    # ---- case 2: multi-step grid + ragged last M block (M=48, tm=32, 2 steps) ----
    B2, H2, W2 = 3, 64, 64
    x2 = jax.random.normal(k_x2, (B2, IN_CHANS, H2, W2), jnp.float32)
    out2 = jax.block_until_ready(forward(x2, params))
    assert out2.shape == (B2, 16, EMBED)
    a2 = im2col_nchw(x2, PATCH).reshape(-1, IN_CHANS * PATCH * PATCH)
    a2_16 = a2.astype(jnp.bfloat16).astype(jnp.float32)
    ref2 = (a2_16 @ w16 + params["proj_b"]).reshape(B2, -1, EMBED)
    assert jnp.allclose(out2, ref2, atol=2e-3, rtol=2e-3)

    print("KERNEL_OK")
</pallas_src>

<mosaic_0001>
module attributes {stable_mosaic.version = 11 : i64} {
  func.func @patch_embed_kernel(%arg0: i32, %arg1: memref<8x768xbf16, #tpu.memory_space<vmem>>, %arg2: memref<768x128xbf16, #tpu.memory_space<vmem>>, %arg3: memref<1x128xf32, #tpu.memory_space<vmem>>, %arg4: memref<8x128xf32, #tpu.memory_space<vmem>>) attributes {dimension_semantics = [#tpu.dimension_semantics<parallel>], iteration_bounds = array<i64: 1>, scalar_prefetch = 0 : i64, scratch_operands = 0 : i64, tpu.core_type = #tpu.core_type<tc>, window_params = [{transform_indices = @transform_0, window_bounds = array<i64: 8, 768>}, {pipeline_mode = #tpu.pipeline_mode<synchronous>, transform_indices = @transform_1, window_bounds = array<i64: 768, 128>}, {pipeline_mode = #tpu.pipeline_mode<synchronous>, transform_indices = @transform_2, window_bounds = array<i64: 1, 128>}, {transform_indices = @transform_3, window_bounds = array<i64: 8, 128>}]} {
    %c0 = arith.constant 0 : index
    %c0_0 = arith.constant 0 : index
    %0 = vector.load %arg1[%c0, %c0_0] : memref<8x768xbf16, #tpu.memory_space<vmem>>, vector<8x768xbf16>
    %c0_1 = arith.constant 0 : index
    %c0_2 = arith.constant 0 : index
    %1 = vector.load %arg2[%c0_1, %c0_2] : memref<768x128xbf16, #tpu.memory_space<vmem>>, vector<768x128xbf16>
    %cst = arith.constant dense<0.000000e+00> : vector<8x128xf32>
    %2 = tpu.matmul %0, %1, %cst {dimension_numbers = #tpu.dot_dimension_numbers<[1], [0], [0], [1], [0, 0, 1, 1], [], []>} : vector<8x768xbf16>, vector<768x128xbf16>, vector<8x128xf32> -> vector<8x128xf32>
    %c0_3 = arith.constant 0 : index
    %c0_4 = arith.constant 0 : index
    %3 = vector.load %arg3[%c0_3, %c0_4] : memref<1x128xf32, #tpu.memory_space<vmem>>, vector<1x128xf32>
    %4 = vector.broadcast %3 : vector<1x128xf32> to vector<8x128xf32>
    %5 = arith.addf %2, %4 : vector<8x128xf32>
    %c0_5 = arith.constant 0 : index
    %c0_6 = arith.constant 0 : index
    %6 = vector.load %arg4[%c0_5, %c0_6] : memref<8x128xf32, #tpu.memory_space<vmem>>, vector<8x128xf32>
    tpu.vector_store %arg4[%c0_5, %c0_6], %5 {strides = array<i32>} : memref<8x128xf32, #tpu.memory_space<vmem>>, vector<8x128xf32>,
    return
  }
  func.func @transform_0(%arg0: i32) -> (i32, i32) {
    %c0_i32 = arith.constant 0 : i32
    %c0_i32_0 = arith.constant 0 : i32
    return %arg0, %c0_i32 : i32, i32
  }
  func.func @transform_1(%arg0: i32) -> (i32, i32) {
    %c0_i32 = arith.constant 0 : i32
    %c0_i32_0 = arith.constant 0 : i32
    %c0_i32_1 = arith.constant 0 : i32
    return %c0_i32, %c0_i32_0 : i32, i32
  }
  func.func @transform_2(%arg0: i32) -> (i32, i32) {
    %c0_i32 = arith.constant 0 : i32
    %c0_i32_0 = arith.constant 0 : i32
    %c0_i32_1 = arith.constant 0 : i32
    return %c0_i32, %c0_i32_0 : i32, i32
  }
  func.func @transform_3(%arg0: i32) -> (i32, i32) {
    %c0_i32 = arith.constant 0 : i32
    %c0_i32_0 = arith.constant 0 : i32
    return %arg0, %c0_i32 : i32, i32
  }
}

</mosaic_0001>

<llo_original>
// kernel: tpu_custom_call.1
$region0: #{tpu_custom_call.1}
  #allocation0 [shape = 'u32[]', space=smem, size = 0x4, offset = 0x4, fixed_abs, tag = 'smem constant byte address 0x4 - core index']
  #allocation1 [shape = 'u32[144,128]{1,0:T(1,128)}', space=vmem, size = 0x12000, scoped, tag = 'internal scratch']
  %s0 = inlined_call_operand.hbm [shape: bf16[8,768], index: 0, kind: input, shape index: {}]
  %s1 = inlined_call_operand.hbm [shape: bf16[768,128], index: 1, kind: input, shape index: {}]
  %s2 = inlined_call_operand.vmem [shape: f32[1,128], index: 2, kind: input, shape index: {}]
  %s3 = inlined_call_operand.hbm [shape: f32[8,128], index: 3, kind: output, shape index: {}]
  %s4 = sld [smem:[#allocation0]]
  $region30: #{tpu_custom_call.1} parent=0
    _
  %s6 = ssub.s32 1, %s4
  %s7 = scalar_select 0, %s6, %s4
  $region1: #{tpu_custom_call.1} parent=0
    #allocation2 [shape = 'u8[12288]{0}', space=vmem, size = 0x3000, scoped, tag = 'input window, operand 0, single buffered']
    #allocation3 [shape = 's32[1]{0}', space=sflag, size = 0x4, scoped, tag = 'scoped memory for tpu_custom_call.1']
    #allocation4 [shape = 's32[1]{0}', space=sflag, size = 0x4, scoped, tag = 'scoped memory for tpu_custom_call.1']
    #allocation5 [shape = 'u8[196608]{0}', space=vmem, size = 0x30000, scoped, tag = 'input window, operand 1, single buffered']
    #allocation6 [shape = 's32[1]{0}', space=sflag, size = 0x4, scoped, tag = 'scoped memory for tpu_custom_call.1']
    #allocation7 [shape = 'u8[4096]{0}', space=vmem, size = 0x1000, scoped, tag = 'output window, operand 0, single buffered']
    %8 = vsyncpa [#allocation3], 0
    %9 = vsyncpa [#allocation6], 0
    %10 = vsyncpa [#allocation4], 0
    // Predicated region
    $region2: #{tpu_custom_call.1} parent=1 // pred_check
      _
    $region3: #{tpu_custom_call.1} parent=1 // pred_check_branch
      %12 = sbr.rel (0) target = $region5
    $region4: #{tpu_custom_call.1} parent=1 // pred_region
      %s14 = ssub.s32 384, 384
      %15 = vsyncadd [#allocation3], %s14
      %s17 = sshll.u32 [#allocation2], 4
      %s18 = int_to_ptr.vmem [resolvable:$true] %s17
      %20 = dma.hbm_to_vmem [thread:$0]  %s0, 384, %s18, [#allocation3]
    $region5: #{tpu_custom_call.1} parent=1 // pred_fallthru
      _
    // Predicated region
    $region6: #{tpu_custom_call.1} parent=1 // pred_check
      _
    $region7: #{tpu_custom_call.1} parent=1 // pred_check_branch
      %22 = sbr.rel (0) target = $region9
    $region8: #{tpu_custom_call.1} parent=1 // pred_region
      %s24 = ssub.s32 6144, 6144
      %25 = vsyncadd [#allocation6], %s24
      %s26 = sshll.u32 [#allocation5], 4
      %s27 = int_to_ptr.vmem [resolvable:$true] %s26
      %32 = dma.hbm_to_vmem [thread:$0]  %s1, 6144, %s27, [#allocation6], 64, 64, 4
    $region9: #{tpu_custom_call.1} parent=1 // pred_fallthru
      _
    // Predicated region
    $region10: #{tpu_custom_call.1} parent=1 // pred_check
      _
    $region11: #{tpu_custom_call.1} parent=1 // pred_check_branch
      %34 = sbr.rel (0) target = $region13
    $region12: #{tpu_custom_call.1} parent=1 // pred_region
      _
    $region13: #{tpu_custom_call.1} parent=1 // pred_fallthru
      _
    // Predicated region
    $region14: #{tpu_custom_call.1} parent=1 // pred_check
      _
    $region15: #{tpu_custom_call.1} parent=1 // pred_check_branch
      %36 = sbr.rel (0) target = $region17
    $region16: #{tpu_custom_call.1} parent=1 // pred_region
      %37 = dma.done [#allocation3], 384
    $region17: #{tpu_custom_call.1} parent=1 // pred_fallthru
      _
    // Predicated region
    $region18: #{tpu_custom_call.1} parent=1 // pred_check
      _
    $region19: #{tpu_custom_call.1} parent=1 // pred_check_branch
      %39 = sbr.rel (0) target = $region21
    $region20: #{tpu_custom_call.1} parent=1 // pred_region
      %40 = dma.done [#allocation6], 6144
    $region21: #{tpu_custom_call.1} parent=1 // pred_fallthru
      _
    %v42 = vld [vmem:[#allocation2] sm:$0xff]
    %v43 = vld [vmem:[#allocation2 + $0x8] sm:$0xff]
    %v44 = vld [vmem:[#allocation2 + $0x10] sm:$0xff]
    %v45 = vld [vmem:[#allocation5] sm:$0xf]
    %v46 = vld [vmem:[#allocation5 + $0x4] sm:$0xf]
    %v47 = vld [vmem:[#allocation5 + $0x8] sm:$0xf]
    %v48 = vld [vmem:[#allocation5 + $0xc] sm:$0xf]
    %v49 = vld [vmem:[#allocation5 + $0x10] sm:$0xf]
    %v50 = vld [vmem:[#allocation5 + $0x14] sm:$0xf]
    %v51 = vld [vmem:[#allocation5 + $0x18] sm:$0xf]
    %v52 = vld [vmem:[#allocation5 + $0x1c] sm:$0xf]
    %v53 = vld [vmem:[#allocation5 + $0x20] sm:$0xf]
    %v54 = vld [vmem:[#allocation5 + $0x24] sm:$0xf]
    %v55 = vld [vmem:[#allocation5 + $0x28] sm:$0xf]
    %v56 = vld [vmem:[#allocation5 + $0x2c] sm:$0xf]
    %v57 = vld [vmem:[#allocation5 + $0x30] sm:$0xf]
    %v58 = vld [vmem:[#allocation5 + $0x34] sm:$0xf]
    %v59 = vld [vmem:[#allocation5 + $0x38] sm:$0xf]
    %v60 = vld [vmem:[#allocation5 + $0x3c] sm:$0xf]
    %v61 = vld [vmem:[#allocation5 + $0x40] sm:$0xf]
    %v62 = vld [vmem:[#allocation5 + $0x44] sm:$0xf]
    %v63 = vld [vmem:[#allocation5 + $0x48] sm:$0xf]
    %v64 = vld [vmem:[#allocation5 + $0x4c] sm:$0xf]
    %v65 = vld [vmem:[#allocation5 + $0x50] sm:$0xf]
    %v66 = vld [vmem:[#allocation5 + $0x54] sm:$0xf]
    %v67 = vld [vmem:[#allocation5 + $0x58] sm:$0xf]
    %v68 = vld [vmem:[#allocation5 + $0x5c] sm:$0xf]
    %v69 = vld [vmem:[#allocation5 + $0x60] sm:$0xf]
    %v70 = vld [vmem:[#allocation5 + $0x64] sm:$0xf]
    %v71 = vld [vmem:[#allocation5 + $0x68] sm:$0xf]
    %v72 = vld [vmem:[#allocation5 + $0x6c] sm:$0xf]
    %v73 = vld [vmem:[#allocation5 + $0x70] sm:$0xf]
    %v74 = vld [vmem:[#allocation5 + $0x74] sm:$0xf]
    %v75 = vld [vmem:[#allocation5 + $0x78] sm:$0xf]
    %v76 = vld [vmem:[#allocation5 + $0x7c] sm:$0xf]
    %v77 = vld [vmem:[#allocation5 + $0x80] sm:$0xf]
    %v78 = vld [vmem:[#allocation5 + $0x84] sm:$0xf]
    %v79 = vld [vmem:[#allocation5 + $0x88] sm:$0xf]
    %v80 = vld [vmem:[#allocation5 + $0x8c] sm:$0xf]
    %v81 = vld [vmem:[#allocation5 + $0x90] sm:$0xf]
    %v82 = vld [vmem:[#allocation5 + $0x94] sm:$0xf]
    %v83 = vld [vmem:[#allocation5 + $0x98] sm:$0xf]
    %v84 = vld [vmem:[#allocation5 + $0x9c] sm:$0xf]
    %v85 = vld [vmem:[#allocation5 + $0xa0] sm:$0xf]
    %v86 = vld [vmem:[#allocation5 + $0xa4] sm:$0xf]
    %v87 = vld [vmem:[#allocation5 + $0xa8] sm:$0xf]
    %v88 = vld [vmem:[#allocation5 + $0xac] sm:$0xf]
    %v89 = vld [vmem:[#allocation5 + $0xb0] sm:$0xf]
    %v90 = vld [vmem:[#allocation5 + $0xb4] sm:$0xf]
    %v91 = vld [vmem:[#allocation5 + $0xb8] sm:$0xf]
    %v92 = vld [vmem:[#allocation5 + $0xbc] sm:$0xf]
    %v93 = vld [vmem:[#allocation5 + $0xc0] sm:$0xf]
    %v94 = vld [vmem:[#allocation5 + $0xc4] sm:$0xf]
    %v95 = vld [vmem:[#allocation5 + $0xc8] sm:$0xf]
    %v96 = vld [vmem:[#allocation5 + $0xcc] sm:$0xf]
    %v97 = vld [vmem:[#allocation5 + $0xd0] sm:$0xf]
    %v98 = vld [vmem:[#allocation5 + $0xd4] sm:$0xf]
    %v99 = vld [vmem:[#allocation5 + $0xd8] sm:$0xf]
    %v100 = vld [vmem:[#allocation5 + $0xdc] sm:$0xf]
    %v101 = vld [vmem:[#allocation5 + $0xe0] sm:$0xf]
    %v102 = vld [vmem:[#allocation5 + $0xe4] sm:$0xf]
    %v103 = vld [vmem:[#allocation5 + $0xe8] sm:$0xf]
    %v104 = vld [vmem:[#allocation5 + $0xec] sm:$0xf]
    %v105 = vld [vmem:[#allocation5 + $0xf0] sm:$0xf]
    %v106 = vld [vmem:[#allocation5 + $0xf4] sm:$0xf]
    %v107 = vld [vmem:[#allocation5 + $0xf8] sm:$0xf]
    %v108 = vld [vmem:[#allocation5 + $0xfc] sm:$0xf]
    %v109 = vld [vmem:[#allocation5 + $0x100] sm:$0xf]
    %v110 = vld [vmem:[#allocation5 + $0x104] sm:$0xf]
    %v111 = vld [vmem:[#allocation5 + $0x108] sm:$0xf]
    %v112 = vld [vmem:[#allocation5 + $0x10c] sm:$0xf]
    %v113 = vld [vmem:[#allocation5 + $0x110] sm:$0xf]
    %v114 = vld [vmem:[#allocation5 + $0x114] sm:$0xf]
    %v115 = vld [vmem:[#allocation5 + $0x118] sm:$0xf]
    %v116 = vld [vmem:[#allocation5 + $0x11c] sm:$0xf]
    %v117 = vld [vmem:[#allocation5 + $0x120] sm:$0xf]
    %v118 = vld [vmem:[#allocation5 + $0x124] sm:$0xf]
    %v119 = vld [vmem:[#allocation5 + $0x128] sm:$0xf]
    %v120 = vld [vmem:[#allocation5 + $0x12c] sm:$0xf]
    %v121 = vld [vmem:[#allocation5 + $0x130] sm:$0xf]
    %v122 = vld [vmem:[#allocation5 + $0x134] sm:$0xf]
    %v123 = vld [vmem:[#allocation5 + $0x138] sm:$0xf]
    %v124 = vld [vmem:[#allocation5 + $0x13c] sm:$0xf]
    %v125 = vld [vmem:[#allocation5 + $0x140] sm:$0xf]
    %v126 = vld [vmem:[#allocation5 + $0x144] sm:$0xf]
    %v127 = vld [vmem:[#allocation5 + $0x148] sm:$0xf]
    %v128 = vld [vmem:[#allocation5 + $0x14c] sm:$0xf]
    %v129 = vld [vmem:[#allocation5 + $0x150] sm:$0xf]
    %v130 = vld [vmem:[#allocation5 + $0x154] sm:$0xf]
    %v131 = vld [vmem:[#allocation5 + $0x158] sm:$0xf]
    %v132 = vld [vmem:[#allocation5 + $0x15c] sm:$0xf]
    %v133 = vld [vmem:[#allocation5 + $0x160] sm:$0xf]
    %v134 = vld [vmem:[#allocation5 + $0x164] sm:$0xf]
    %v135 = vld [vmem:[#allocation5 + $0x168] sm:$0xf]
    %v136 = vld [vmem:[#allocation5 + $0x16c] sm:$0xf]
    %v137 = vld [vmem:[#allocation5 + $0x170] sm:$0xf]
    %v138 = vld [vmem:[#allocation5 + $0x174] sm:$0xf]
    %v139 = vld [vmem:[#allocation5 + $0x178] sm:$0xf]
    %v140 = vld [vmem:[#allocation5 + $0x17c] sm:$0xf]
    %v141 = vld [vmem:[%s2] sm:$0x1]
    %v143 = vlaneseq
    %v144 = vshrl.u32 %v143, 7
    %v145 = vsub.s32 0, %v144
    %v146 = vrot.slane %v141, %v145
    %v151 = vunpack.c.l.b16 %v42
    %v152 = vunpack.c.h.b16 %v42
    %v153 = vunpack.c.l.b16 %v43
    %v154 = vunpack.c.h.b16 %v43
    %v155 = vunpack.c.l.b16 %v44
    %v156 = vunpack.c.h.b16 %v44
    %v157 = vpack.c.b16 %v151, %v151
    %v158 = vpack.c.b16 %v152, %v152
    %v159 = vpack.c.b16 %v153, %v153
    %v160 = vpack.c.b16 %v154, %v154
    %v161 = vpack.c.b16 %v155, %v155
    %v162 = vpack.c.b16 %v156, %v156
    %v265 = vunpack.c.l.b16 %v45
    %v266 = vunpack.c.l.b16 %v46
    %v267 = vunpack.c.l.b16 %v47
    %v268 = vunpack.c.l.b16 %v48
    %v269 = vunpack.c.l.b16 %v49
    %v270 = vunpack.c.l.b16 %v50
    %v271 = vunpack.c.l.b16 %v51
    %v272 = vunpack.c.l.b16 %v52
    %v273 = vunpack.c.l.b16 %v53
    %v274 = vunpack.c.l.b16 %v54
    %v275 = vunpack.c.l.b16 %v55
    %v276 = vunpack.c.l.b16 %v56
    %v277 = vunpack.c.l.b16 %v57
    %v278 = vunpack.c.l.b16 %v58
    %v279 = vunpack.c.l.b16 %v59
    %v280 = vunpack.c.l.b16 %v60
    %v281 = vunpack.c.l.b16 %v61
    %v282 = vunpack.c.l.b16 %v62
    %v283 = vunpack.c.l.b16 %v63
    %v284 = vunpack.c.l.b16 %v64
    %v285 = vunpack.c.l.b16 %v65
    %v286 = vunpack.c.l.b16 %v66
    %v287 = vunpack.c.l.b16 %v67
    %v288 = vunpack.c.l.b16 %v68
    %v289 = vunpack.c.l.b16 %v69
    %v290 = vunpack.c.l.b16 %v70
    %v291 = vunpack.c.l.b16 %v71
    %v292 = vunpack.c.l.b16 %v72
    %v293 = vunpack.c.l.b16 %v73
    %v294 = vunpack.c.l.b16 %v74
    %v295 = vunpack.c.l.b16 %v75
    %v296 = vunpack.c.l.b16 %v76
    %v297 = vunpack.c.l.b16 %v77
    %v298 = vunpack.c.l.b16 %v78
    %v299 = vunpack.c.l.b16 %v79
    %v300 = vunpack.c.l.b16 %v80
    %v301 = vunpack.c.l.b16 %v81
    %v302 = vunpack.c.l.b16 %v82
    %v303 = vunpack.c.l.b16 %v83
    %v304 = vunpack.c.l.b16 %v84
    %v305 = vunpack.c.l.b16 %v85
    %v306 = vunpack.c.l.b16 %v86
    %v307 = vunpack.c.l.b16 %v87
    %v308 = vunpack.c.l.b16 %v88
    %v309 = vunpack.c.l.b16 %v89
    %v310 = vunpack.c.l.b16 %v90
    %v311 = vunpack.c.l.b16 %v91
    %v312 = vunpack.c.l.b16 %v92
    %v313 = vunpack.c.l.b16 %v93
    %v314 = vunpack.c.l.b16 %v94
    %v315 = vunpack.c.l.b16 %v95
    %v316 = vunpack.c.l.b16 %v96
    %v317 = vunpack.c.l.b16 %v97
    %v318 = vunpack.c.l.b16 %v98
    %v319 = vunpack.c.l.b16 %v99
    %v320 = vunpack.c.l.b16 %v100
    %v321 = vunpack.c.l.b16 %v101
    %v322 = vunpack.c.l.b16 %v102
    %v323 = vunpack.c.l.b16 %v103
    %v324 = vunpack.c.l.b16 %v104
    %v325 = vunpack.c.l.b16 %v105
    %v326 = vunpack.c.l.b16 %v106
    %v327 = vunpack.c.l.b16 %v107
    %v328 = vunpack.c.l.b16 %v108
    %v329 = vunpack.c.l.b16 %v109
    %v330 = vunpack.c.l.b16 %v110
    %v331 = vunpack.c.l.b16 %v111
    %v332 = vunpack.c.l.b16 %v112
    %v333 = vunpack.c.l.b16 %v113
    %v334 = vunpack.c.l.b16 %v114
    %v335 = vunpack.c.l.b16 %v115
    %v336 = vunpack.c.l.b16 %v116
    %v337 = vunpack.c.l.b16 %v117
    %v338 = vunpack.c.l.b16 %v118
    %v339 = vunpack.c.l.b16 %v119
    %v340 = vunpack.c.l.b16 %v120
    %v341 = vunpack.c.l.b16 %v121
    %v342 = vunpack.c.l.b16 %v122
    %v343 = vunpack.c.l.b16 %v123
    %v344 = vunpack.c.l.b16 %v124
    %v345 = vunpack.c.l.b16 %v125
    %v346 = vunpack.c.l.b16 %v126
    %v347 = vunpack.c.l.b16 %v127
    %v348 = vunpack.c.l.b16 %v128
    %v349 = vunpack.c.l.b16 %v129
    %v350 = vunpack.c.l.b16 %v130
    %v351 = vunpack.c.l.b16 %v131
    %v352 = vunpack.c.l.b16 %v132
    %v353 = vunpack.c.l.b16 %v133
    %v354 = vunpack.c.l.b16 %v134
    %v355 = vunpack.c.l.b16 %v135
    %v356 = vunpack.c.l.b16 %v136
    %v357 = vunpack.c.l.b16 %v137
    %v358 = vunpack.c.l.b16 %v138
    %v359 = vunpack.c.l.b16 %v139
    %v360 = vunpack.c.l.b16 %v140
    %v361 = vpack.c.b16 %v266, %v265
    %v362 = vpack.c.b16 %v268, %v267
    %v363 = vpack.c.b16 %v270, %v269
    %v364 = vpack.c.b16 %v272, %v271
    %v365 = vpack.c.b16 %v274, %v273
    %v366 = vpack.c.b16 %v276, %v275
    %v367 = vpack.c.b16 %v278, %v277
    %v368 = vpack.c.b16 %v280, %v279
    %v369 = vpack.c.b16 %v282, %v281
    %v370 = vpack.c.b16 %v284, %v283
    %v371 = vpack.c.b16 %v286, %v285
    %v372 = vpack.c.b16 %v288, %v287
    %v373 = vpack.c.b16 %v290, %v289
    %v374 = vpack.c.b16 %v292, %v291
    %v375 = vpack.c.b16 %v294, %v293
    %v376 = vpack.c.b16 %v296, %v295
    %v377 = vpack.c.b16 %v298, %v297
    %v378 = vpack.c.b16 %v300, %v299
    %v379 = vpack.c.b16 %v302, %v301
    %v380 = vpack.c.b16 %v304, %v303
    %v381 = vpack.c.b16 %v306, %v305
    %v382 = vpack.c.b16 %v308, %v307
    %v383 = vpack.c.b16 %v310, %v309
    %v384 = vpack.c.b16 %v312, %v311
    %v385 = vpack.c.b16 %v314, %v313
    %v386 = vpack.c.b16 %v316, %v315
    %v387 = vpack.c.b16 %v318, %v317
    %v388 = vpack.c.b16 %v320, %v319
    %v389 = vpack.c.b16 %v322, %v321
    %v390 = vpack.c.b16 %v324, %v323
    %v391 = vpack.c.b16 %v326, %v325
    %v392 = vpack.c.b16 %v328, %v327
    %v393 = vpack.c.b16 %v330, %v329
    %v394 = vpack.c.b16 %v332, %v331
    %v395 = vpack.c.b16 %v334, %v333
    %v396 = vpack.c.b16 %v336, %v335
    %v397 = vpack.c.b16 %v338, %v337
    %v398 = vpack.c.b16 %v340, %v339
    %v399 = vpack.c.b16 %v342, %v341
    %v400 = vpack.c.b16 %v344, %v343
    %v401 = vpack.c.b16 %v346, %v345
    %v402 = vpack.c.b16 %v348, %v347
    %v403 = vpack.c.b16 %v350, %v349
    %v404 = vpack.c.b16 %v352, %v351
    %v405 = vpack.c.b16 %v354, %v353
    %v406 = vpack.c.b16 %v356, %v355
    %v407 = vpack.c.b16 %v358, %v357
    %v408 = vpack.c.b16 %v360, %v359
    %457 = vmatprep.subr.bf16.mxu0 0
    %458 = vmatpush1.bf16.msra.mxu0 %v368
    %459 = vmatprep.subr.bf16.mxu0 0
    %460 = vmatpush1.bf16.msra.mxu0 %v367
    %461 = vmatprep.subr.bf16.mxu0 0
    %462 = vmatpush1.bf16.msra.mxu0 %v366
    %463 = vmatprep.subr.bf16.mxu0 0
    %464 = vmatpush1.bf16.msra.mxu0 %v365
    %465 = vmatprep.subr.bf16.mxu0 0
    %466 = vmatpush1.bf16.msra.mxu0 %v364
    %467 = vmatprep.subr.bf16.mxu0 0
    %468 = vmatpush1.bf16.msra.mxu0 %v363
    %469 = vmatprep.subr.bf16.mxu0 0
    %470 = vmatpush1.bf16.msra.mxu0 %v362
    %471 = vmatprep.subr.bf16.mxu0 0
    %472 = vmatpush1.bf16.msra.mxu0 %v361
    %473 = vmatprep.subr.bf16.mxu0 0
    %474 = vmatpush2.bf16.msra.mxu0 %v376
    %475 = vmatprep.subr.bf16.mxu0 0
    %476 = vmatpush2.bf16.msra.mxu0 %v375
    %477 = vmatprep.subr.bf16.mxu0 0
    %478 = vmatpush2.bf16.msra.mxu0 %v374
    %479 = vmatprep.subr.bf16.mxu0 0
    %480 = vmatpush2.bf16.msra.mxu0 %v373
    %481 = vmatprep.subr.bf16.mxu0 0
    %482 = vmatpush2.bf16.msra.mxu0 %v372
    %483 = vmatprep.subr.bf16.mxu0 0
    %484 = vmatpush2.bf16.msra.mxu0 %v371
    %485 = vmatprep.subr.bf16.mxu0 0
    %486 = vmatpush2.bf16.msra.mxu0 %v370
    %487 = vmatprep.subr.bf16.mxu0 0
    %488 = vmatpush2.bf16.msra.mxu0 %v369
    %489 = vmatprep.mubr.bf16.mxu0 %v158
    %490 = vmatmul.mubr.bf16.gmra.mxu0 %v157
    %v491 = vpop.f32.mrf.mxu0
    %v492 = vadd.f32 %v146, %v491
    %v493 = vpop.f32.mrf.mxu0
    %v494 = vpop.f32.mrf.mxu0
    %v495 = vpop.f32.mrf.mxu0
    %496 = vdwg.mxu0
    %497 = vmatprep.subr.bf16.mxu0 0
    %498 = vmatpush1.bf16.msra.mxu0 %v384
    %499 = vmatprep.subr.bf16.mxu0 0
    %500 = vmatpush1.bf16.msra.mxu0 %v383
    %501 = vmatprep.subr.bf16.mxu0 0
    %502 = vmatpush1.bf16.msra.mxu0 %v382
    %503 = vmatprep.subr.bf16.mxu0 0
    %504 = vmatpush1.bf16.msra.mxu0 %v381
    %505 = vmatprep.subr.bf16.mxu0 0
    %506 = vmatpush1.bf16.msra.mxu0 %v380
    %507 = vmatprep.subr.bf16.mxu0 0
    %508 = vmatpush1.bf16.msra.mxu0 %v379
    %509 = vmatprep.subr.bf16.mxu0 0
    %510 = vmatpush1.bf16.msra.mxu0 %v378
    %511 = vmatprep.subr.bf16.mxu0 0
    %512 = vmatpush1.bf16.msra.mxu0 %v377
    %513 = vmatprep.subr.bf16.mxu0 0
    %514 = vmatpush2.bf16.msra.mxu0 %v392
    %515 = vmatprep.subr.bf16.mxu0 0
    %516 = vmatpush2.bf16.msra.mxu0 %v391
    %517 = vmatprep.subr.bf16.mxu0 0
    %518 = vmatpush2.bf16.msra.mxu0 %v390
    %519 = vmatprep.subr.bf16.mxu0 0
    %520 = vmatpush2.bf16.msra.mxu0 %v389
    %521 = vmatprep.subr.bf16.mxu0 0
    %522 = vmatpush2.bf16.msra.mxu0 %v388
    %523 = vmatprep.subr.bf16.mxu0 0
    %524 = vmatpush2.bf16.msra.mxu0 %v387
    %525 = vmatprep.subr.bf16.mxu0 0
    %526 = vmatpush2.bf16.msra.mxu0 %v386
    %527 = vmatprep.subr.bf16.mxu0 0
    %528 = vmatpush2.bf16.msra.mxu0 %v385
    %529 = vmatprep.mubr.bf16.mxu0 %v160
    %530 = vmatmul.mubr.bf16.gmra.mxu0 %v159
    %v531 = vpop.f32.mrf.mxu0
    %v532 = vadd.f32 %v492, %v531
    %v533 = vpop.f32.mrf.mxu0
    %v534 = vpop.f32.mrf.mxu0
    %v535 = vpop.f32.mrf.mxu0
    %536 = vdwg.mxu0
    %537 = vmatprep.subr.bf16.mxu0 0
    %538 = vmatpush1.bf16.msra.mxu0 %v400
    %539 = vmatprep.subr.bf16.mxu0 0
    %540 = vmatpush1.bf16.msra.mxu0 %v399
    %541 = vmatprep.subr.bf16.mxu0 0
    %542 = vmatpush1.bf16.msra.mxu0 %v398
    %543 = vmatprep.subr.bf16.mxu0 0
    %544 = vmatpush1.bf16.msra.mxu0 %v397
    %545 = vmatprep.subr.bf16.mxu0 0
    %546 = vmatpush1.bf16.msra.mxu0 %v396
    %547 = vmatprep.subr.bf16.mxu0 0
    %548 = vmatpush1.bf16.msra.mxu0 %v395
    %549 = vmatprep.subr.bf16.mxu0 0
    %550 = vmatpush1.bf16.msra.mxu0 %v394
    %551 = vmatprep.subr.bf16.mxu0 0
    %552 = vmatpush1.bf16.msra.mxu0 %v393
    %553 = vmatprep.subr.bf16.mxu0 0
    %554 = vmatpush2.bf16.msra.mxu0 %v408
    %555 = vmatprep.subr.bf16.mxu0 0
    %556 = vmatpush2.bf16.msra.mxu0 %v407
    %557 = vmatprep.subr.bf16.mxu0 0
    %558 = vmatpush2.bf16.msra.mxu0 %v406
    %559 = vmatprep.subr.bf16.mxu0 0
    %560 = vmatpush2.bf16.msra.mxu0 %v405
    %561 = vmatprep.subr.bf16.mxu0 0
    %562 = vmatpush2.bf16.msra.mxu0 %v404
    %563 = vmatprep.subr.bf16.mxu0 0
    %564 = vmatpush2.bf16.msra.mxu0 %v403
    %565 = vmatprep.subr.bf16.mxu0 0
    %566 = vmatpush2.bf16.msra.mxu0 %v402
    %567 = vmatprep.subr.bf16.mxu0 0
    %568 = vmatpush2.bf16.msra.mxu0 %v401
    %569 = vmatprep.mubr.bf16.mxu0 %v162
    %570 = vmatmul.mubr.bf16.gmra.mxu0 %v161
    %v571 = vpop.f32.mrf.mxu0
    %v572 = vadd.f32 %v532, %v571
    %v573 = vpop.f32.mrf.mxu0
    %v574 = vpop.f32.mrf.mxu0
    %v575 = vpop.f32.mrf.mxu0
    %576 = vdwg.mxu0
    %577 = vst [vmem:[#allocation7] sm:$0xff] %v572
    // Predicated region
    $region22: #{tpu_custom_call.1} parent=1 // pred_check
      _
    $region23: #{tpu_custom_call.1} parent=1 // pred_check_branch
      %579 = sbr.rel (0) target = $region25
    $region24: #{tpu_custom_call.1} parent=1 // pred_region
      %s581 = ssub.s32 128, 128
      %582 = vsyncadd [#allocation4], %s581
      %s584 = sshll.u32 [#allocation7], 4
      %s585 = int_to_ptr.vmem [resolvable:$true] %s584
      %587 = dma.vmem_to_hbm [thread:$0]  %s585, 128, %s3, [#allocation4]
    $region25: #{tpu_custom_call.1} parent=1 // pred_fallthru
      _
    // Predicated region
    $region26: #{tpu_custom_call.1} parent=1 // pred_check
      _
    $region27: #{tpu_custom_call.1} parent=1 // pred_check_branch
      %589 = sbr.rel (0) target = $region29
    $region28: #{tpu_custom_call.1} parent=1 // pred_region
      %590 = dma.done [#allocation4], 128
    $region29: #{tpu_custom_call.1} parent=1 // pred_fallthru
      _
    %591 = vsyncpa [#allocation3], 1
    %592 = vsyncpa [#allocation6], 1
    %593 = vsyncpa [#allocation4], 1

</llo_original>
